<compile_context>
chip_gen: v7x
topology: tpu7x:2x2x1
jax: 0.10.0
libtpu: 0.0.40
codegen_flags: <defaults>
</compile_context>

<pallas_src>
import jax
import jax.numpy as jnp
from jax.experimental import pallas as pl
from jax.experimental.pallas import tpu as pltpu

EPS = 1e-5


# ---------------------------------------------------------------------------
# Kernels
# ---------------------------------------------------------------------------
def _stats1_kernel(x_ref, w1_ref, sum_ref, sq_ref):
    """Accumulate per-channel sum / sum-of-squares of y1 = W1 @ relu(x)."""
    @pl.when(pl.program_id(1) == 0)
    def _init():
        sum_ref[...] = jnp.zeros_like(sum_ref)
        sq_ref[...] = jnp.zeros_like(sq_ref)

    h = jnp.maximum(x_ref[0].astype(jnp.float32), 0.0)               # (C, TM)
    # TODO(synk): cast operands to bf16 for the MXU when C >= 128 (v6e/v7x).
    y1 = jnp.dot(w1_ref[...], h, preferred_element_type=jnp.float32)  # (C, TM)
    sum_ref[0, :, :] += jnp.sum(y1, axis=1, keepdims=True)
    sq_ref[0, :, :] += jnp.sum(y1 * y1, axis=1, keepdims=True)


def _stats2_kernel(x_ref, w1_ref, sc1_ref, sh1_ref, w2_ref, sum_ref, sq_ref):
    """Accumulate stats of y2 = W2 @ relu(BN1(W1 @ relu(x))); conv1 recomputed."""
    @pl.when(pl.program_id(1) == 0)
    def _init():
        sum_ref[...] = jnp.zeros_like(sum_ref)
        sq_ref[...] = jnp.zeros_like(sq_ref)

    h = jnp.maximum(x_ref[0].astype(jnp.float32), 0.0)
    y1 = jnp.dot(w1_ref[...], h, preferred_element_type=jnp.float32)
    h2 = jnp.maximum(y1 * sc1_ref[...] + sh1_ref[...], 0.0)
    y2 = jnp.dot(w2_ref[...], h2, preferred_element_type=jnp.float32)
    sum_ref[0, :, :] += jnp.sum(y2, axis=1, keepdims=True)
    sq_ref[0, :, :] += jnp.sum(y2 * y2, axis=1, keepdims=True)


def _final_kernel(x_ref, w1_ref, sc1_ref, sh1_ref, w2_ref, sc2_ref, sh2_ref,
                  o_ref):
    """out = x + BN2(W2 @ relu(BN1(W1 @ relu(x)))) with folded BN affines."""
    x = x_ref[0].astype(jnp.float32)
    h = jnp.maximum(x, 0.0)
    y1 = jnp.dot(w1_ref[...], h, preferred_element_type=jnp.float32)
    h2 = jnp.maximum(y1 * sc1_ref[...] + sh1_ref[...], 0.0)
    y2 = jnp.dot(w2_ref[...], h2, preferred_element_type=jnp.float32)
    b2 = y2 * sc2_ref[...] + sh2_ref[...]
    o_ref[0, :, :] = (x + b2).astype(o_ref.dtype)


# ---------------------------------------------------------------------------
# Wrapper
# ---------------------------------------------------------------------------
def _choose_tile(hw, c, max_tile_bytes):
    """Largest multiple-of-128 lane tile that divides hw and fits the budget."""
    if hw % 128 != 0:
        # TODO(synk): pad + mask the ragged tail instead of one full-HW block.
        return hw
    max_lanes = max(128, (max_tile_bytes // (4 * c)) // 128 * 128)
    tm = min(hw, max_lanes)
    while hw % tm != 0:
        tm -= 128
    return tm


def _fold_bn(sum_c, sq_c, count, gamma, beta):
    """Fold batch stats + affine into a per-channel scale/shift."""
    mean = sum_c / count
    var = jnp.maximum(sq_c / count - mean * mean, 0.0)
    scale = gamma * jax.lax.rsqrt(var + EPS)
    shift = beta - mean * scale
    return scale, shift


def resblock(x_nchw, params, *, max_tile_bytes=2 * 1024 * 1024):
    """x_nchw: (N, C, H, W).  Returns (N, C, H, W)."""
    w1, _b1, g1, be1, w2, _b2, g2, be2 = params  # conv biases cancelled by BN
    N, C, H, W = x_nchw.shape
    HW = H * W
    M = N * HW
    tm = _choose_tile(HW, C, max_tile_bytes)
    grid = (N, HW // tm)

    x = x_nchw.reshape(N, C, HW)                 # free reshape; no transpose

    x_spec = pl.BlockSpec((1, C, tm), lambda n, m: (n, 0, m))
    mat_spec = pl.BlockSpec((C, C), lambda n, m: (0, 0))    # resident weights
    vec_spec = pl.BlockSpec((C, 1), lambda n, m: (0, 0))    # resident BN params
    stat_spec = pl.BlockSpec((1, C, 1), lambda n, m: (n, 0, 0))
    out_spec = pl.BlockSpec((1, C, tm), lambda n, m: (n, 0, m))

    stat_shape = jax.ShapeDtypeStruct((N, C, 1), jnp.float32)
    acc_cp = pltpu.CompilerParams(
        dimension_semantics=("parallel", "arbitrary"),
        vmem_limit_bytes=32 * 1024 * 1024)
    par_cp = pltpu.CompilerParams(
        dimension_semantics=("parallel", "parallel"),
        vmem_limit_bytes=32 * 1024 * 1024)

    # Pass 1: stats of y1 = W1 @ relu(x) (per-n partials, reduced below).
    s1, q1 = pl.pallas_call(
        _stats1_kernel,
        grid=grid,
        in_specs=[x_spec, mat_spec],
        out_specs=(stat_spec, stat_spec),
        out_shape=(stat_shape, stat_shape),
        compiler_params=acc_cp,
    )(x, w1)
    sc1, sh1 = _fold_bn(jnp.sum(s1, axis=0), jnp.sum(q1, axis=0), M, g1, be1)

    # Pass 2: stats of y2 (conv1 recomputed instead of spilling y1 to HBM).
    s2, q2 = pl.pallas_call(
        _stats2_kernel,
        grid=grid,
        in_specs=[x_spec, mat_spec, vec_spec, vec_spec, mat_spec],
        out_specs=(stat_spec, stat_spec),
        out_shape=(stat_shape, stat_shape),
        compiler_params=acc_cp,
    )(x, w1, sc1, sh1, w2)
    sc2, sh2 = _fold_bn(jnp.sum(s2, axis=0), jnp.sum(q2, axis=0), M, g2, be2)

    # Pass 3: normalize + residual; fully parallel, lane-dense output blocks.
    out = pl.pallas_call(
        _final_kernel,
        grid=grid,
        in_specs=[x_spec, mat_spec, vec_spec, vec_spec, mat_spec,
                  vec_spec, vec_spec],
        out_specs=out_spec,
        out_shape=jax.ShapeDtypeStruct((N, C, HW), x_nchw.dtype),
        compiler_params=par_cp,
    )(x, w1, sc1, sh1, w2, sc2, sh2)

    return out.reshape(N, C, H, W)


# ---------------------------------------------------------------------------
# Plain-JAX reference (PyTorch semantics: conv biases + training-mode BN)
# ---------------------------------------------------------------------------
def resblock_ref(x_nchw, params):
    w1, b1, g1, be1, w2, b2, g2, be2 = params
    N, C, H, W = x_nchw.shape
    x = x_nchw.reshape(N, C, H * W)

    def conv1x1(h, w, b):
        return jnp.einsum('oc,nch->noh', w, h) + b.reshape(1, C, 1)

    def bn(y, g, be):
        mean = jnp.mean(y, axis=(0, 2), keepdims=True)
        var = jnp.mean((y - mean) ** 2, axis=(0, 2), keepdims=True)
        return ((y - mean) * jax.lax.rsqrt(var + EPS) * g.reshape(1, C, 1)
                + be.reshape(1, C, 1))

    h = jnp.maximum(x, 0.0)
    y = bn(conv1x1(h, w1, b1), g1, be1)
    h = jnp.maximum(y, 0.0)
    y = bn(conv1x1(h, w2, b2), g2, be2)
    return (x + y).reshape(N, C, H, W)


def make_params(key, dim):
    """Synthetic params matching nn.Conv2d(dim,dim,1) + nn.BatchNorm2d(dim)."""
    ks = jax.random.split(key, 4)
    scale = 1.0 / jnp.sqrt(dim)  # conv1x1 fan_in = dim
    w1 = jax.random.uniform(ks[0], (dim, dim), jnp.float32, -scale, scale)
    b1 = jax.random.uniform(ks[1], (dim, 1), jnp.float32, -scale, scale)
    w2 = jax.random.uniform(ks[2], (dim, dim), jnp.float32, -scale, scale)
    b2 = jax.random.uniform(ks[3], (dim, 1), jnp.float32, -scale, scale)
    g1 = jnp.ones((dim, 1), jnp.float32)   # BN default init: gamma=1, beta=0
    be1 = jnp.zeros((dim, 1), jnp.float32)
    g2 = jnp.ones((dim, 1), jnp.float32)
    be2 = jnp.zeros((dim, 1), jnp.float32)
    return (w1, b1, g1, be1, w2, b2, g2, be2)


if __name__ == "__main__":
    key = jax.random.PRNGKey(0)
    k_x, k_p = jax.random.split(key)

    N, C, H, W = 2, 8, 16, 16
    x = jax.random.normal(k_x, (N, C, H, W), jnp.float32)
    params = make_params(k_p, C)

    ref = jax.block_until_ready(resblock_ref(x, params))

    # Small tile budget -> TM = 128, grid (N, 2): exercises the multi-tile
    # accumulate-then-finalize BatchNorm path.
    out_tiled = jax.block_until_ready(resblock(x, params,
                                               max_tile_bytes=4 * 1024))
    # Default budget -> TM = HW (single m-tile per sample).
    out_full = jax.block_until_ready(resblock(x, params))

    for out in (out_tiled, out_full):
        assert out.shape == x.shape and out.dtype == x.dtype
        err = float(jnp.max(jnp.abs(out - ref)))
        assert err < 1e-4, f"mismatch vs reference: max abs err = {err}"
    print("KERNEL_OK")
</pallas_src>

<mosaic_0001>
module attributes {stable_mosaic.version = 11 : i64} {
  func.func @_stats1_kernel(%arg0: i32, %arg1: i32, %arg2: memref<1x8x128xf32, #tpu.memory_space<vmem>>, %arg3: memref<8x8xf32, #tpu.memory_space<vmem>>, %arg4: memref<1x8x1xf32, #tpu.memory_space<vmem>>, %arg5: memref<1x8x1xf32, #tpu.memory_space<vmem>>) attributes {dimension_semantics = [#tpu.dimension_semantics<parallel>, #tpu.dimension_semantics<arbitrary>], iteration_bounds = array<i64: 2, 2>, scalar_prefetch = 0 : i64, scratch_operands = 0 : i64, tpu.core_type = #tpu.core_type<tc>, window_params = [{transform_indices = @transform_0, window_bounds = array<i64: 1, 8, 128>}, {pipeline_mode = #tpu.pipeline_mode<synchronous>, transform_indices = @transform_1, window_bounds = array<i64: 8, 8>}, {transform_indices = @transform_2, window_bounds = array<i64: 1, 8, 1>}, {transform_indices = @transform_3, window_bounds = array<i64: 1, 8, 1>}]} {
    %c0_i32 = arith.constant 0 : i32
    %0 = arith.cmpi eq, %arg1, %c0_i32 : i32
    %1 = arith.extui %0 : i1 to i32
    %c0_i32_0 = arith.constant 0 : i32
    %2 = arith.cmpi ne, %1, %c0_i32_0 : i32
    scf.if %2 {
      %cst_20 = arith.constant 0.000000e+00 : f32
      %26 = vector.broadcast %cst_20 : f32 to vector<1x8x1xf32>
      %c0_21 = arith.constant 0 : index
      %c0_22 = arith.constant 0 : index
      %c0_23 = arith.constant 0 : index
      %27 = vector.load %arg4[%c0_21, %c0_22, %c0_23] : memref<1x8x1xf32, #tpu.memory_space<vmem>>, vector<1x8x1xf32>
      tpu.vector_store %arg4[%c0_21, %c0_22, %c0_23], %26 {strides = array<i32>} : memref<1x8x1xf32, #tpu.memory_space<vmem>>, vector<1x8x1xf32>,
      %cst_24 = arith.constant 0.000000e+00 : f32
      %28 = vector.broadcast %cst_24 : f32 to vector<1x8x1xf32>
      %c0_25 = arith.constant 0 : index
      %c0_26 = arith.constant 0 : index
      %c0_27 = arith.constant 0 : index
      %29 = vector.load %arg5[%c0_25, %c0_26, %c0_27] : memref<1x8x1xf32, #tpu.memory_space<vmem>>, vector<1x8x1xf32>
      tpu.vector_store %arg5[%c0_25, %c0_26, %c0_27], %28 {strides = array<i32>} : memref<1x8x1xf32, #tpu.memory_space<vmem>>, vector<1x8x1xf32>,
    } else {
    }
    %c0 = arith.constant 0 : index
    %c0_1 = arith.constant 0 : index
    %c0_2 = arith.constant 0 : index
    %3 = vector.load %arg2[%c0, %c0_1, %c0_2] : memref<1x8x128xf32, #tpu.memory_space<vmem>>, vector<1x8x128xf32>
    %4 = vector.shape_cast %3 : vector<1x8x128xf32> to vector<8x128xf32>
    %cst = arith.constant 0.000000e+00 : f32
    %5 = vector.broadcast %cst : f32 to vector<8x128xf32>
    %6 = arith.maximumf %4, %5 : vector<8x128xf32>
    %c0_3 = arith.constant 0 : index
    %c0_4 = arith.constant 0 : index
    %7 = vector.load %arg3[%c0_3, %c0_4] : memref<8x8xf32, #tpu.memory_space<vmem>>, vector<8x8xf32>
    %cst_5 = arith.constant dense<0.000000e+00> : vector<8x128xf32>
    %8 = tpu.matmul %7, %6, %cst_5 {dimension_numbers = #tpu.dot_dimension_numbers<[1], [0], [0], [1], [0, 0, 1, 1], [], []>} : vector<8x8xf32>, vector<8x128xf32>, vector<8x128xf32> -> vector<8x128xf32>
    %c0_6 = arith.constant 0 : index
    %c0_7 = arith.constant 0 : index
    %c0_8 = arith.constant 0 : index
    %9 = vector.load %arg4[%c0_6, %c0_7, %c0_8] : memref<1x8x1xf32, #tpu.memory_space<vmem>>, vector<1x8x1xf32>
    %10 = vector.shape_cast %9 : vector<1x8x1xf32> to vector<8x1xf32>
    %cst_9 = arith.constant dense<0.000000e+00> : vector<8xf32>
    %11 = vector.multi_reduction <add>, %8, %cst_9 [1] : vector<8x128xf32> to vector<8xf32>
    %12 = vector.shape_cast %11 : vector<8xf32> to vector<8x1xf32>
    %13 = arith.addf %10, %12 : vector<8x1xf32>
    %c0_10 = arith.constant 0 : index
    %c0_11 = arith.constant 0 : index
    %c0_12 = arith.constant 0 : index
    %14 = vector.load %arg4[%c0_10, %c0_11, %c0_12] : memref<1x8x1xf32, #tpu.memory_space<vmem>>, vector<1x8x1xf32>
    %15 = vector.shape_cast %14 : vector<1x8x1xf32> to vector<8x1xf32>
    %16 = vector.shape_cast %13 : vector<8x1xf32> to vector<1x8x1xf32>
    tpu.vector_store %arg4[%c0_10, %c0_11, %c0_12], %16 {strides = array<i32>} : memref<1x8x1xf32, #tpu.memory_space<vmem>>, vector<1x8x1xf32>,
    %c0_13 = arith.constant 0 : index
    %c0_14 = arith.constant 0 : index
    %c0_15 = arith.constant 0 : index
    %17 = vector.load %arg5[%c0_13, %c0_14, %c0_15] : memref<1x8x1xf32, #tpu.memory_space<vmem>>, vector<1x8x1xf32>
    %18 = vector.shape_cast %17 : vector<1x8x1xf32> to vector<8x1xf32>
    %19 = arith.mulf %8, %8 : vector<8x128xf32>
    %cst_16 = arith.constant dense<0.000000e+00> : vector<8xf32>
    %20 = vector.multi_reduction <add>, %19, %cst_16 [1] : vector<8x128xf32> to vector<8xf32>
    %21 = vector.shape_cast %20 : vector<8xf32> to vector<8x1xf32>
    %22 = arith.addf %18, %21 : vector<8x1xf32>
    %c0_17 = arith.constant 0 : index
    %c0_18 = arith.constant 0 : index
    %c0_19 = arith.constant 0 : index
    %23 = vector.load %arg5[%c0_17, %c0_18, %c0_19] : memref<1x8x1xf32, #tpu.memory_space<vmem>>, vector<1x8x1xf32>
    %24 = vector.shape_cast %23 : vector<1x8x1xf32> to vector<8x1xf32>
    %25 = vector.shape_cast %22 : vector<8x1xf32> to vector<1x8x1xf32>
    tpu.vector_store %arg5[%c0_17, %c0_18, %c0_19], %25 {strides = array<i32>} : memref<1x8x1xf32, #tpu.memory_space<vmem>>, vector<1x8x1xf32>,
    return
  }
  func.func @transform_0(%arg0: i32, %arg1: i32) -> (i32, i32, i32) {
    %c0_i32 = arith.constant 0 : i32
    %c0_i32_0 = arith.constant 0 : i32
    return %arg0, %c0_i32, %arg1 : i32, i32, i32
  }
  func.func @transform_1(%arg0: i32, %arg1: i32) -> (i32, i32) {
    %c0_i32 = arith.constant 0 : i32
    %c0_i32_0 = arith.constant 0 : i32
    %c0_i32_1 = arith.constant 0 : i32
    return %c0_i32, %c0_i32_0 : i32, i32
  }
  func.func @transform_2(%arg0: i32, %arg1: i32) -> (i32, i32, i32) {
    %c0_i32 = arith.constant 0 : i32
    %c0_i32_0 = arith.constant 0 : i32
    %c0_i32_1 = arith.constant 0 : i32
    return %arg0, %c0_i32, %c0_i32_0 : i32, i32, i32
  }
  func.func @transform_3(%arg0: i32, %arg1: i32) -> (i32, i32, i32) {
    %c0_i32 = arith.constant 0 : i32
    %c0_i32_0 = arith.constant 0 : i32
    %c0_i32_1 = arith.constant 0 : i32
    return %arg0, %c0_i32, %c0_i32_0 : i32, i32, i32
  }
}

</mosaic_0001>

<llo_original>
// kernel: tpu_custom_call.1
$region0: #{tpu_custom_call.1}
  #allocation0 [shape = 'u32[]', space=smem, size = 0x4, offset = 0x4, fixed_abs, tag = 'smem constant byte address 0x4 - core index']
  #allocation1 [shape = 'u32[144,128]{1,0:T(1,128)}', space=vmem, size = 0x12000, scoped, tag = 'internal scratch']
  %s0 = inlined_call_operand.hbm [shape: f32[2,8,256], index: 0, kind: input, shape index: {}]
  %s1 = inlined_call_operand.hbm [shape: f32[8,8], index: 1, kind: input, shape index: {}]
  %s2 = inlined_call_operand.vmem [shape: f32[2,8,1], index: 2, kind: output, shape index: {0}]
  %s3 = inlined_call_operand.vmem [shape: f32[2,8,1], index: 3, kind: output, shape index: {1}]
  %4 = xla_tuple %s2, %s3
  %s5 = sld [smem:[#allocation0]]
  $region61: #{tpu_custom_call.1} parent=0
    _
  %s7 = ssub.s32 1, %s5
  %s8 = scalar_select 0, %s7, %s5
  $region1: #{tpu_custom_call.1} parent=0
    #allocation2 [shape = 'u8[8192]{0}', space=vmem, size = 0x2000, scoped, tag = 'input window, operand 0']
    #allocation3 [shape = 's32[2]{0}', space=sflag, size = 0x8, scoped, tag = 'scoped memory for tpu_custom_call.1']
    #allocation4 [shape = 'u8[4096]{0}', space=vmem, size = 0x1000, scoped, tag = 'input window, operand 1, single buffered']
    #allocation5 [shape = 's32[1]{0}', space=sflag, size = 0x4, scoped, tag = 'scoped memory for tpu_custom_call.1']
    %9 = vsyncpa [#allocation3], 0
    %s10 = scalar_lea.sflag [#allocation3], 1
    %11 = vsyncpa %s10, 0
    %12 = vsyncpa [#allocation5], 0
    loop: start=0, step=1, limit=6
    $region2: #{tpu_custom_call.1} parent=1 // loop_pre_header
      _
    $region3: #{tpu_custom_call.1} parent=1 // loop_header
      %s14 = sphi 0, %s18
      %p15 = scmp.ge.s32.totalorder %s14, 6
      %s21 = sphi 0, %s33
      %s22 = sphi 0, %s29
      %s23 = sphi 0, %s21
      %s24 = sphi 0, %s22
      %s25 = sphi 0, %s23
      %s26 = sphi 0, %s24
      %s38 = sphi 0, %s40
      %s41 = sphi 0, %s38
      %s42 = sphi 0, %s41
      %s58 = sphi 0, %s42
      %s62 = sphi 0, %s62
      %s64 = sphi 0, %s62
      %s65 = sphi 0, %s64
      %s79 = sphi 0, %s65
      %s85 = sphi 0, %s87
      %s88 = sphi 0, %s85
      %s89 = sphi 0, %s88
      %s105 = sphi 0, %s89
      %s111 = sphi 0, %s113
      %s114 = sphi 0, %s111
      %s115 = sphi 0, %s114
      %s131 = sphi 0, %s115
    $region4: #{tpu_custom_call.1} parent=1 // loop_header_branch
      %17 = sbr.rel (%p15) target = $region8
    $region5: #{tpu_custom_call.1} parent=1 // loop_body
      %s19 = ssub.s32 %s14, 1
      %s20 = ssub.s32 %s14, 2
      %s27 = sadd.s32 1, %s22
      %p28 = scmp.ge.s32.totalorder %s27, 2
      %s29 = scalar_select %p28, 0, %s27
      %s30 = sadd.s32 1, %s21
      %s31 = scalar_select %p28, %s30, %s21
      %p32 = scmp.ge.s32.totalorder %s31, 2
      %s33 = scalar_select %p32, 0, %s31
      %s34 = ssub.s32 %s21, %s33
      %s35 = ssub.s32 %s22, %s29
      %s36 = sor.u32 %s34, %s35
      %p37 = scmp.eq.s32.totalorder %s36, 0
      %s39 = sadd.s32 %s38, 1
      %s40 = scalar_select %p37, %s38, %s39
      %p43 = pneg %p37
      %p44 = scmp.eq.s32.totalorder %s14, 3
      %p45 = por %p43, %p44
      %p46 = scmp.ne.s32.totalorder %s38, %s41
      %p47 = scmp.eq.s32.totalorder %s14, 0
      %p48 = por %p46, %p47
      %p49 = scmp.ne.s32.totalorder %s38, %s41
      %p50 = scmp.eq.s32.totalorder %s19, 3
      %p51 = por %p49, %p50
      %p52 = scmp.ne.s32.totalorder %s41, %s42
      %p53 = scmp.eq.s32.totalorder %s19, 0
      %p54 = por %p52, %p53
      %p55 = scmp.ne.s32.totalorder %s41, %s42
      %p56 = scmp.eq.s32.totalorder %s20, 3
      %p57 = por %p55, %p56
      %p59 = scmp.ne.s32.totalorder %s42, %s58
      %p60 = scmp.eq.s32.totalorder %s20, 0
      %p61 = por %p59, %p60
      %s63 = sadd.s32 %s62, 1
      %p66 = scmp.eq.s32.totalorder %s14, 3
      %p67 = scmp.ne.s32.totalorder %s62, %s64
      %p68 = scmp.eq.s32.totalorder %s14, 0
      %p69 = por %p67, %p68
      %p70 = scmp.ne.s32.totalorder %s62, %s64
      %p71 = scmp.eq.s32.totalorder %s19, 3
      %p72 = por %p70, %p71
      %p73 = scmp.ne.s32.totalorder %s64, %s65
      %p74 = scmp.eq.s32.totalorder %s19, 0
      %p75 = por %p73, %p74
      %p76 = scmp.ne.s32.totalorder %s64, %s65
      %p77 = scmp.eq.s32.totalorder %s20, 3
      %p78 = por %p76, %p77
      %p80 = scmp.ne.s32.totalorder %s65, %s79
      %p81 = scmp.eq.s32.totalorder %s20, 0
      %p82 = por %p80, %p81
      %s83 = ssub.s32 %s21, %s33
      %p84 = scmp.eq.s32.totalorder %s83, 0
      %s86 = sadd.s32 %s85, 1
      %s87 = scalar_select %p84, %s85, %s86
      %p90 = pneg %p84
      %p91 = scmp.eq.s32.totalorder %s14, 3
      %p92 = por %p90, %p91
      %p93 = scmp.ne.s32.totalorder %s85, %s88
      %p94 = scmp.eq.s32.totalorder %s14, 0
      %p95 = por %p93, %p94
      %p96 = scmp.ne.s32.totalorder %s85, %s88
      %p97 = scmp.eq.s32.totalorder %s19, 3
      %p98 = por %p96, %p97
      %p99 = scmp.ne.s32.totalorder %s88, %s89
      %p100 = scmp.eq.s32.totalorder %s19, 0
      %p101 = por %p99, %p100
      %p102 = scmp.ne.s32.totalorder %s88, %s89
      %p103 = scmp.eq.s32.totalorder %s20, 3
      %p104 = por %p102, %p103
      %p106 = scmp.ne.s32.totalorder %s89, %s105
      %p107 = scmp.eq.s32.totalorder %s20, 0
      %p108 = por %p106, %p107
      %s109 = ssub.s32 %s21, %s33
      %p110 = scmp.eq.s32.totalorder %s109, 0
      %s112 = sadd.s32 %s111, 1
      %s113 = scalar_select %p110, %s111, %s112
      %p116 = pneg %p110
      %p117 = scmp.eq.s32.totalorder %s14, 3
      %p118 = por %p116, %p117
      %p119 = scmp.ne.s32.totalorder %s111, %s114
      %p120 = scmp.eq.s32.totalorder %s14, 0
      %p121 = por %p119, %p120
      %p122 = scmp.ne.s32.totalorder %s111, %s114
      %p123 = scmp.eq.s32.totalorder %s19, 3
      %p124 = por %p122, %p123
      %p125 = scmp.ne.s32.totalorder %s114, %s115
      %p126 = scmp.eq.s32.totalorder %s19, 0
      %p127 = por %p125, %p126
      %p128 = scmp.ne.s32.totalorder %s114, %s115
      %p129 = scmp.eq.s32.totalorder %s20, 3
      %p130 = por %p128, %p129
      %p132 = scmp.ne.s32.totalorder %s115, %s131
      %p133 = scmp.eq.s32.totalorder %s20, 0
      %p134 = por %p132, %p133
      %p135 = scmp.le.s32.totalorder 1, %s14
      %p136 = scmp.lt.s32.totalorder %s14, 5
      %p137 = pnand %p135, %p136
      %p138 = pneg %p137
      // Predicated region
      $region9: #{tpu_custom_call.1} parent=5 // pred_check
        _
      $region10: #{tpu_custom_call.1} parent=5 // pred_check_branch
        %140 = sbr.rel (%p137) target = $region12
      $region11: #{tpu_custom_call.1} parent=5 // pred_region
        %s141 = ssub.s32 %s14, 1
        // Predicated region
        $region13: #{tpu_custom_call.1} parent=11 // pred_check
          %p142 = pneg %p75
        $region14: #{tpu_custom_call.1} parent=11 // pred_check_branch
          %144 = sbr.rel (%p142) target = $region16
        $region15: #{tpu_custom_call.1} parent=11 // pred_region
          %s146 = ssub.s32 128, 128
          %147 = vsyncadd [#allocation5], %s146
          %s149 = sshll.u32 [#allocation4], 4
          %s150 = int_to_ptr.vmem [resolvable:$true] %s149
          %152 = dma.hbm_to_vmem [thread:$0]  %s1, 128, %s150, [#allocation5]
        $region16: #{tpu_custom_call.1} parent=11 // pred_fallthru
          _
      $region12: #{tpu_custom_call.1} parent=5 // pred_fallthru
        _
      %p153 = scmp.lt.s32.totalorder %s14, 4
      // Predicated region
      $region17: #{tpu_custom_call.1} parent=5 // pred_check
        %p154 = pneg %p153
      $region18: #{tpu_custom_call.1} parent=5 // pred_check_branch
        %156 = sbr.rel (%p154) target = $region20
      $region19: #{tpu_custom_call.1} parent=5 // pred_region
        // Predicated region
        $region21: #{tpu_custom_call.1} parent=19 // pred_check
          %p157 = pneg %p48
        $region22: #{tpu_custom_call.1} parent=19 // pred_check_branch
          %159 = sbr.rel (%p157) target = $region24
        $region23: #{tpu_custom_call.1} parent=19 // pred_region
          %s160 = sand.u32 %s38, 1
          %s161 = scalar_lea.sflag [#allocation3], %s160
          %s162 = sand.u32 %s38, 1
          %s163 = smul.addr %s162, 8
          %s164 = scalar_lea.vmem [#allocation2], %s163
          %s166 = ssub.s32 128, 128
          %167 = vsyncadd %s161, %s166
          %s168 = smul.addr %s21, 2
          %s169 = sadd.s32 %s22, %s168
          %s170 = smul.addr %s169, 128
          %s171 = scalar_lea.hbm %s0, %s170
          %s173 = sshll.u32 %s164, 4
          %s174 = int_to_ptr.vmem [resolvable:$true] %s173
          %176 = dma.hbm_to_vmem [thread:$0]  %s171, 128, %s174, %s161
        $region24: #{tpu_custom_call.1} parent=19 // pred_fallthru
          _
      $region20: #{tpu_custom_call.1} parent=5 // pred_fallthru
        _
      %p177 = scmp.le.s32.totalorder 1, %s14
      %p178 = scmp.lt.s32.totalorder %s14, 5
      %p179 = pnand %p177, %p178
      %p180 = pneg %p179
      // Predicated region
      $region25: #{tpu_custom_call.1} parent=5 // pred_check
        _
      $region26: #{tpu_custom_call.1} parent=5 // pred_check_branch
        %182 = sbr.rel (%p179) target = $region28
      $region27: #{tpu_custom_call.1} parent=5 // pred_region
        %s183 = ssub.s32 %s14, 1
        %s184 = sand.u32 %s41, 1
        %s185 = scalar_lea.sflag [#allocation3], %s184
        %s186 = sand.u32 %s41, 1
        %s187 = smul.addr %s186, 8
        %s188 = scalar_lea.vmem [#allocation2], %s187
        // Predicated region
        $region29: #{tpu_custom_call.1} parent=27 // pred_check
          %p189 = pneg %p54
        $region30: #{tpu_custom_call.1} parent=27 // pred_check_branch
          %191 = sbr.rel (%p189) target = $region32
        $region31: #{tpu_custom_call.1} parent=27 // pred_region
          %192 = dma.done %s185, 128
        $region32: #{tpu_custom_call.1} parent=27 // pred_fallthru
          _
        // Predicated region
        $region33: #{tpu_custom_call.1} parent=27 // pred_check
          %p193 = pneg %p75
        $region34: #{tpu_custom_call.1} parent=27 // pred_check_branch
          %195 = sbr.rel (%p193) target = $region36
        $region35: #{tpu_custom_call.1} parent=27 // pred_region
          %196 = dma.done [#allocation5], 128
        $region36: #{tpu_custom_call.1} parent=27 // pred_fallthru
          _
        %s197 = sand.u32 %s41, 1
        %s198 = scalar_lea.sflag [#allocation3], %s197
        %s199 = sand.u32 %s41, 1
        %s200 = smul.addr %s199, 8
        %s201 = scalar_lea.vmem [#allocation2], %s200
        %p202 = pneg %p54
        %p203 = pneg %p51
        %p204 = pneg %p75
        %p205 = pneg %p72
        %p206 = pneg %p101
        %p207 = pneg %p98
        %p208 = scmp.lt.s32.totalorder %s23, 1
        %s209 = scalar_select %p208, %s23, 1
        %s210 = smul.addr %s209, 8
        %s211 = scalar_lea.vmem %s2, %s210
        %p212 = pneg %p127
        %p213 = pneg %p124
        %p214 = scmp.lt.s32.totalorder %s23, 1
        %s215 = scalar_select %p214, %s23, 1
        %s216 = smul.addr %s215, 8
        %s217 = scalar_lea.vmem %s3, %s216
        %p218 = scmp.lt.s32.totalorder %s23, 1
        %s219 = scalar_select %p218, %s23, 1
        %s220 = smul.addr %s219, 8
        %s221 = scalar_lea.vmem %s2, %s220
        %p222 = scmp.lt.s32.totalorder %s23, 1
        %s223 = scalar_select %p222, %s23, 1
        %s224 = smul.addr %s223, 8
        %s225 = scalar_lea.vmem %s3, %s224
        %p226 = scmp.eq.s32.totalorder %s24, 0
        // Predicated region
        $region37: #{tpu_custom_call.1} parent=27 // pred_check
          %p227 = pneg %p226
        $region38: #{tpu_custom_call.1} parent=27 // pred_check_branch
          %229 = sbr.rel (%p227) target = $region40
        $region39: #{tpu_custom_call.1} parent=27 // pred_region
          %vm230 = vcmask 7168
          %231 = vst.msk [vmem:[%s221] sm:$0xff] %vm230, 0.0
          %232 = vst.msk [vmem:[%s225] sm:$0xff] %vm230, 0.0
        $region40: #{tpu_custom_call.1} parent=27 // pred_fallthru
          _
        %v233 = vld [vmem:[%s188] sm:$0xff]
        %v234 = vmax.f32 %v233, 0.0
        %v235 = vld [vmem:[#allocation4] sm:$0xff]
        %vm236 = vcmask 64512
        %v238 = vsel %vm236, %v235, 0
        %240 = vmatprep.subr.mxu0 0.0
        %241 = vmatpush1.msra.mxu0 %v234
        %242 = vmatprep.subr.mxu0 0.0
        %243 = vmatpush1.msra.mxu0 0.0
        %244 = vmatprep.subr.mxu0 0.0
        %245 = vmatpush1.msra.mxu0 0.0
        %246 = vmatprep.subr.mxu0 0.0
        %247 = vmatpush1.msra.mxu0 0.0
        %248 = vmatprep.subr.mxu0 0.0
        %249 = vmatpush1.msra.mxu0 0.0
        %250 = vmatprep.subr.mxu0 0.0
        %251 = vmatpush1.msra.mxu0 0.0
        %252 = vmatprep.subr.mxu0 0.0
        %253 = vmatpush1.msra.mxu0 0.0
        %254 = vmatprep.subr.mxu0 0.0
        %255 = vmatpush1.msra.mxu0 0.0
        %256 = vmatprep.subr.mxu0 0.0
        %257 = vmatpush1.msra.mxu0 0.0
        %258 = vmatprep.subr.mxu0 0.0
        %259 = vmatpush1.msra.mxu0 0.0
        %260 = vmatprep.subr.mxu0 0.0
        %261 = vmatpush1.msra.mxu0 0.0
        %262 = vmatprep.subr.mxu0 0.0
        %263 = vmatpush1.msra.mxu0 0.0
        %264 = vmatprep.subr.mxu0 0.0
        %265 = vmatpush1.msra.mxu0 0.0
        %266 = vmatprep.subr.mxu0 0.0
        %267 = vmatpush1.msra.mxu0 0.0
        %268 = vmatprep.subr.mxu0 0.0
        %269 = vmatpush1.msra.mxu0 0.0
        %270 = vmatprep.subr.mxu0 0.0
        %271 = vmatpush1.msra.mxu0 0.0
        %272 = vmatprep.subr.mxu0 0.0
        %273 = vmatpush1.msra.mxu0 0.0
        %274 = vmatprep.subr.mxu0 0.0
        %275 = vmatpush1.msra.mxu0 0.0
        %276 = vmatprep.subr.mxu0 0.0
        %277 = vmatpush1.msra.mxu0 0.0
        %278 = vmatprep.subr.mxu0 0.0
        %279 = vmatpush1.msra.mxu0 0.0
        %280 = vmatprep.subr.mxu0 0.0
        %281 = vmatpush1.msra.mxu0 0.0
        %282 = vmatprep.subr.mxu0 0.0
        %283 = vmatpush1.msra.mxu0 0.0
        %284 = vmatprep.subr.mxu0 0.0
        %285 = vmatpush1.msra.mxu0 0.0
        %286 = vmatprep.subr.mxu0 0.0
        %287 = vmatpush1.msra.mxu0 0.0
        %288 = vmatprep.subr.mxu0 0.0
        %289 = vmatpush1.msra.mxu0 0.0
        %290 = vmatprep.subr.mxu0 0.0
        %291 = vmatpush1.msra.mxu0 0.0
        %292 = vmatprep.subr.mxu0 0.0
        %293 = vmatpush1.msra.mxu0 0.0
        %294 = vmatprep.subr.mxu0 0.0
        %295 = vmatpush1.msra.mxu0 0.0
        %296 = vmatprep.subr.mxu0 0.0
        %297 = vmatpush1.msra.mxu0 0.0
        %298 = vmatprep.subr.mxu0 0.0
        %299 = vmatpush1.msra.mxu0 0.0
        %300 = vmatprep.subr.mxu0 0.0
        %301 = vmatpush1.msra.mxu0 0.0
        %302 = vmatprep.subr.mxu0 0.0
        %303 = vmatpush1.msra.mxu0 0.0
        %304 = vmatprep.mubr.f32.mxu0 0.0
        %305 = vmatmul.mubr.f32.gmra.mrb[0].mxu0 %v238
        %v306 = vpop.f32.mrb[0].mxu0
        %v307 = vadd.f32 0.0, %v306
        %v308 = vpop.f32.mrb[0].mxu0
        %309 = vdwg.mxu0
        %v310 = vld [vmem:[%s221] sm:$0xff]
        %311 = vadd.xlane.f32.xlu0 %v307
        %v312 = vpop.xlane.xlu0 %311
        %v313 = vadd.f32 %v310, %v312
        %vm314 = vcmask 7168
        %315 = vst.msk [vmem:[%s221] sm:$0xff] %vm314, %v313
        %v316 = vld [vmem:[%s225] sm:$0xff]
        %v317 = vmul.f32 %v307, %v307
        %318 = vadd.xlane.f32.xlu0 %v317
        %v319 = vpop.xlane.xlu0 %318
        %v320 = vadd.f32 %v316, %v319
        %321 = vst.msk [vmem:[%s225] sm:$0xff] %vm314, %v320
        %p322 = scmp.lt.s32.totalorder %s23, 1
        %s323 = scalar_select %p322, %s23, 1
        %s324 = smul.addr %s323, 8
        %s325 = scalar_lea.vmem %s2, %s324
        %p326 = scmp.lt.s32.totalorder %s23, 1
        %s327 = scalar_select %p326, %s23, 1
        %s328 = smul.addr %s327, 8
        %s329 = scalar_lea.vmem %s3, %s328
        // Predicated region
        $region41: #{tpu_custom_call.1} parent=27 // pred_check
          %p330 = pneg %p98
        $region42: #{tpu_custom_call.1} parent=27 // pred_check_branch
          %332 = sbr.rel (%p330) target = $region44
        $region43: #{tpu_custom_call.1} parent=27 // pred_region
          _
        $region44: #{tpu_custom_call.1} parent=27 // pred_fallthru
          _
        // Predicated region
        $region45: #{tpu_custom_call.1} parent=27 // pred_check
          %p333 = pneg %p124
        $region46: #{tpu_custom_call.1} parent=27 // pred_check_branch
          %335 = sbr.rel (%p333) target = $region48
        $region47: #{tpu_custom_call.1} parent=27 // pred_region
          _
        $region48: #{tpu_custom_call.1} parent=27 // pred_fallthru
          _
      $region28: #{tpu_custom_call.1} parent=5 // pred_fallthru
        _
      %p336 = scmp.le.s32.totalorder 2, %s14
      // Predicated region
      $region49: #{tpu_custom_call.1} parent=5 // pred_check
        %p337 = pneg %p336
      $region50: #{tpu_custom_call.1} parent=5 // pred_check_branch
        %339 = sbr.rel (%p337) target = $region52
      $region51: #{tpu_custom_call.1} parent=5 // pred_region
        %s340 = ssub.s32 %s14, 2
        // Predicated region
        $region53: #{tpu_custom_call.1} parent=51 // pred_check
          %p341 = pneg %p104
        $region54: #{tpu_custom_call.1} parent=51 // pred_check_branch
          %343 = sbr.rel (%p341) target = $region56
        $region55: #{tpu_custom_call.1} parent=51 // pred_region
          %p344 = scmp.lt.s32.totalorder %s25, 1
          %s345 = scalar_select %p344, %s25, 1
          %s346 = smul.addr %s345, 8
          %s347 = scalar_lea.vmem %s2, %s346
        $region56: #{tpu_custom_call.1} parent=51 // pred_fallthru
          _
        // Predicated region
        $region57: #{tpu_custom_call.1} parent=51 // pred_check
          %p348 = pneg %p130
        $region58: #{tpu_custom_call.1} parent=51 // pred_check_branch
          %350 = sbr.rel (%p348) target = $region60
        $region59: #{tpu_custom_call.1} parent=51 // pred_region
          %p351 = scmp.lt.s32.totalorder %s25, 1
          %s352 = scalar_select %p351, %s25, 1
          %s353 = smul.addr %s352, 8
          %s354 = scalar_lea.vmem %s3, %s353
        $region60: #{tpu_custom_call.1} parent=51 // pred_fallthru
          _
      $region52: #{tpu_custom_call.1} parent=5 // pred_fallthru
        _
    $region6: #{tpu_custom_call.1} parent=1 // loop_footer
      %s18 = sadd.s32 1, %s14
    $region7: #{tpu_custom_call.1} parent=1 // loop_footer_branch
      %13 = sbr.rel target = $region3
    $region8: #{tpu_custom_call.1} parent=1 // loop_exit
      _
    %355 = vsyncpa [#allocation3], 1
    %s356 = scalar_lea.sflag [#allocation3], 1
    %357 = vsyncpa %s356, 1
    %358 = vsyncpa [#allocation5], 1

</llo_original>
